<compile_context>
chip_gen: v5e
topology: v5e:2x2
jax: 0.10.0
libtpu: 0.0.40
codegen_flags: <defaults>
</compile_context>

<pallas_src>
import functools

import jax
import jax.numpy as jnp
import numpy as np
from jax.experimental import pallas as pl
from jax.experimental.pallas import tpu as pltpu


# ----------------------------- Pallas kernel -------------------------------


def residual_block_kernel(x_ref, w1_ref, w2_ref, b1_ref, b2_ref, o_ref,
                          scr_ref, *, N, H, WC):
    """Single grid step, whole batch.

    x_ref  : (N, H, WC)      lane-packed NHWC input (WC = W*C, ideally 128)
    w*_ref : (3, WC, WC)     banded block weights per kernel row (BN folded)
    b*_ref : (1, WC)         folded BN bias (conv bias absorbed), tiled over W
    o_ref  : (N, H, WC)      lane-packed output
    scr_ref: (N, H+2, WC)    VMEM halo scratch (reused for conv1 and conv2)
    """
    zero_row = jnp.zeros((N, 1, WC), jnp.float32)
    # Zero the 1-row top/bottom halo once; interior gets overwritten below.
    scr_ref[:, 0:1, :] = zero_row
    scr_ref[:, H + 1:H + 2, :] = zero_row
    # conv1 input = x
    scr_ref[:, 1:H + 1, :] = x_ref[...]

    def conv_banded(w_ref, bias_ref):
        # out[:, h, :] = sum_kh rows[:, h+kh, :] @ W_band[kh]  (+ bias)
        acc = jnp.zeros((N * H, WC), jnp.float32)
        for kh in range(3):
            rows = scr_ref[:, kh:kh + H, :].reshape(N * H, WC)
            acc = acc + jnp.dot(rows, w_ref[kh],
                                preferred_element_type=jnp.float32)
        return acc + bias_ref[...]          # (1, WC) broadcasts over rows

    # conv1 + BN1(folded) + ReLU
    y1 = jnp.maximum(conv_banded(w1_ref, b1_ref), 0.0)
    # conv2 input = y1 (reuse the same halo scratch; border rows stay zero)
    scr_ref[:, 1:H + 1, :] = y1.reshape(N, H, WC)
    # conv2 + BN2(folded)
    y2 = conv_banded(w2_ref, b2_ref)

    # residual add + ReLU (lane-dense store)
    resid = x_ref[...].reshape(N * H, WC)
    o_ref[...] = jnp.maximum(resid + y2, 0.0).reshape(N, H, WC)


# ------------------------------- wrapper ------------------------------------


def residual_block_pallas(x_nchw, params, eps=1e-5):
    (w1, bc1, g1, be1, m1, v1,
     w2, bc2, g2, be2, m2, v2) = params
    N, C, H, W = x_nchw.shape
    WC = W * C

    # NCHW -> NHWC -> lane-packed (N, H, W*C); done once in XLA (tiny arrays).
    x = jnp.transpose(x_nchw, (0, 2, 3, 1)).astype(jnp.float32)
    x_packed = x.reshape(N, H, WC)

    # Fold eval-mode BN + conv bias:
    #   BN(conv(x) + bc) = conv(x)*s + ((bc - mean)*s + beta)
    s1 = g1 / jnp.sqrt(v1 + eps)
    b1 = (bc1 - m1) * s1 + be1
    s2 = g2 / jnp.sqrt(v2 + eps)
    b2 = (bc2 - m2) * s2 + be2

    def banded_weights(w_oihw, s):
        """OIHW (Cout,Cin,3,3) -> (3, W*C, W*C) banded block matrices.

        band[kh][wi*C+ci, wo*C+co] = W[kh, kw, ci, co] * s[co]
            where wi = wo + kw - 1 and 0 <= wi < W  (zero-pad in W implicit).
        BN scale s is folded into the output-channel axis.
        """
        w_hwio = jnp.transpose(w_oihw, (2, 3, 1, 0)) * s[None, None, None, :]
        mats = []
        for kh in range(3):
            B = jnp.zeros((WC, WC), jnp.float32)
            for kw in range(3):
                shift = jnp.eye(W, k=1 - kw, dtype=jnp.float32)  # wi==wo+kw-1
                B = B + jnp.kron(shift, w_hwio[kh, kw])
            mats.append(B)
        return jnp.stack(mats)

    w1_band = banded_weights(w1, s1)
    w2_band = banded_weights(w2, s2)
    b1p = jnp.tile(b1, W).reshape(1, WC)
    b2p = jnp.tile(b2, W).reshape(1, WC)

    kern = functools.partial(residual_block_kernel, N=N, H=H, WC=WC)

    out_packed = pl.pallas_call(
        kern,
        out_shape=jax.ShapeDtypeStruct((N, H, WC), jnp.float32),
        grid_spec=pltpu.PrefetchScalarGridSpec(
            num_scalar_prefetch=0,
            grid=(1,),                       # whole batch in one step
            in_specs=[
                pl.BlockSpec((N, H, WC), lambda i: (0, 0, 0)),
                pl.BlockSpec((3, WC, WC), lambda i: (0, 0, 0)),
                pl.BlockSpec((3, WC, WC), lambda i: (0, 0, 0)),
                pl.BlockSpec((1, WC), lambda i: (0, 0)),
                pl.BlockSpec((1, WC), lambda i: (0, 0)),
            ],
            out_specs=pl.BlockSpec((N, H, WC), lambda i: (0, 0, 0)),
            scratch_shapes=[pltpu.VMEM((N, H + 2, WC), jnp.float32)],
        ),
        compiler_params=pltpu.CompilerParams(
            dimension_semantics=("arbitrary",)),
    )(x_packed, w1_band, w2_band, b1p, b2p)

    out_nhwc = out_packed.reshape(N, H, W, C)
    return jnp.transpose(out_nhwc, (0, 3, 1, 2))  # back to NCHW


# ------------------------- pure-JAX reference --------------------------------


def residual_block_ref(x, params, eps=1e-5):
    (w1, bc1, g1, be1, m1, v1,
     w2, bc2, g2, be2, m2, v2) = params

    def conv(x, w, b):
        y = jax.lax.conv_general_dilated(
            x, w, window_strides=(1, 1), padding="SAME",
            dimension_numbers=("NCHW", "OIHW", "NCHW"))
        return y + b[None, :, None, None]

    def bn(x, g, be, m, v):
        return ((x - m[None, :, None, None]) /
                jnp.sqrt(v[None, :, None, None] + eps)
                * g[None, :, None, None] + be[None, :, None, None])

    y = jax.nn.relu(bn(conv(x, w1, bc1), g1, be1, m1, v1))
    y = bn(conv(y, w2, bc2), g2, be2, m2, v2)
    return jax.nn.relu(x + y)


# --------------------------------- main --------------------------------------


if __name__ == "__main__":
    N, C, H, W = 2, 8, 16, 16          # W*C = 128 -> fully lane-dense
    key = jax.random.PRNGKey(0)
    ks = jax.random.split(key, 13)

    def mk_params(k0):
        k = jax.random.split(k0, 6)
        w = 0.1 * jax.random.normal(k[0], (C, C, 3, 3), jnp.float32)
        bc = 0.1 * jax.random.normal(k[1], (C,), jnp.float32)
        g = 1.0 + 0.1 * jax.random.normal(k[2], (C,), jnp.float32)
        be = 0.1 * jax.random.normal(k[3], (C,), jnp.float32)
        m = 0.1 * jax.random.normal(k[4], (C,), jnp.float32)
        v = 0.5 + jnp.abs(jax.random.normal(k[5], (C,), jnp.float32))
        return w, bc, g, be, m, v

    params = mk_params(ks[0]) + mk_params(ks[1])
    x = jax.random.normal(ks[2], (N, C, H, W), jnp.float32)  # PyTorch NCHW

    out = jax.block_until_ready(residual_block_pallas(x, params))
    ref = jax.block_until_ready(residual_block_ref(x, params))

    np.testing.assert_allclose(np.asarray(out), np.asarray(ref),
                               rtol=5e-4, atol=5e-4)
    print("KERNEL_OK")
</pallas_src>

<mosaic_0001>
module attributes {stable_mosaic.version = 11 : i64} {
  func.func @residual_block_kernel(%arg0: i32, %arg1: memref<2x16x128xf32, #tpu.memory_space<vmem>>, %arg2: memref<3x128x128xf32, #tpu.memory_space<vmem>>, %arg3: memref<3x128x128xf32, #tpu.memory_space<vmem>>, %arg4: memref<1x128xf32, #tpu.memory_space<vmem>>, %arg5: memref<1x128xf32, #tpu.memory_space<vmem>>, %arg6: memref<2x16x128xf32, #tpu.memory_space<vmem>>, %arg7: memref<2x18x128xf32, #tpu.memory_space<vmem>>) attributes {dimension_semantics = [#tpu.dimension_semantics<arbitrary>], iteration_bounds = array<i64: 1>, scalar_prefetch = 0 : i64, scratch_operands = 1 : i64, tpu.core_type = #tpu.core_type<tc>, window_params = [{pipeline_mode = #tpu.pipeline_mode<synchronous>, transform_indices = @transform_0, window_bounds = array<i64: 2, 16, 128>}, {pipeline_mode = #tpu.pipeline_mode<synchronous>, transform_indices = @transform_1, window_bounds = array<i64: 3, 128, 128>}, {pipeline_mode = #tpu.pipeline_mode<synchronous>, transform_indices = @transform_2, window_bounds = array<i64: 3, 128, 128>}, {pipeline_mode = #tpu.pipeline_mode<synchronous>, transform_indices = @transform_3, window_bounds = array<i64: 1, 128>}, {pipeline_mode = #tpu.pipeline_mode<synchronous>, transform_indices = @transform_4, window_bounds = array<i64: 1, 128>}, {pipeline_mode = #tpu.pipeline_mode<synchronous>, transform_indices = @transform_5, window_bounds = array<i64: 2, 16, 128>}]} {
    %cst = arith.constant 0.000000e+00 : f32
    %0 = vector.broadcast %cst : f32 to vector<2x1x128xf32>
    %c0 = arith.constant 0 : index
    %c0_0 = arith.constant 0 : index
    %c0_1 = arith.constant 0 : index
    %1 = vector.load %arg7[%c0, %c0_0, %c0_1] : memref<2x18x128xf32, #tpu.memory_space<vmem>>, vector<2x1x128xf32>
    tpu.vector_store %arg7[%c0, %c0_0, %c0_1], %0 {strides = array<i32>} : memref<2x18x128xf32, #tpu.memory_space<vmem>>, vector<2x1x128xf32>,
    %c0_2 = arith.constant 0 : index
    %c17 = arith.constant 17 : index
    %c0_3 = arith.constant 0 : index
    %2 = vector.load %arg7[%c0_2, %c17, %c0_3] : memref<2x18x128xf32, #tpu.memory_space<vmem>>, vector<2x1x128xf32>
    tpu.vector_store %arg7[%c0_2, %c17, %c0_3], %0 {strides = array<i32>} : memref<2x18x128xf32, #tpu.memory_space<vmem>>, vector<2x1x128xf32>,
    %c0_4 = arith.constant 0 : index
    %c0_5 = arith.constant 0 : index
    %c0_6 = arith.constant 0 : index
    %3 = vector.load %arg1[%c0_4, %c0_5, %c0_6] : memref<2x16x128xf32, #tpu.memory_space<vmem>>, vector<2x16x128xf32>
    %c0_7 = arith.constant 0 : index
    %c1 = arith.constant 1 : index
    %c0_8 = arith.constant 0 : index
    %4 = vector.load %arg7[%c0_7, %c1, %c0_8] : memref<2x18x128xf32, #tpu.memory_space<vmem>>, vector<2x16x128xf32>
    tpu.vector_store %arg7[%c0_7, %c1, %c0_8], %3 {strides = array<i32>} : memref<2x18x128xf32, #tpu.memory_space<vmem>>, vector<2x16x128xf32>,
    %cst_9 = arith.constant 0.000000e+00 : f32
    %5 = vector.broadcast %cst_9 : f32 to vector<32x128xf32>
    %c0_10 = arith.constant 0 : index
    %c0_11 = arith.constant 0 : index
    %c0_12 = arith.constant 0 : index
    %6 = vector.load %arg7[%c0_10, %c0_11, %c0_12] : memref<2x18x128xf32, #tpu.memory_space<vmem>>, vector<2x16x128xf32>
    %7 = vector.shape_cast %6 : vector<2x16x128xf32> to vector<32x128xf32>
    %c0_13 = arith.constant 0 : index
    %c0_14 = arith.constant 0 : index
    %c0_15 = arith.constant 0 : index
    %8 = vector.load %arg2[%c0_13, %c0_14, %c0_15] : memref<3x128x128xf32, #tpu.memory_space<vmem>>, vector<1x128x128xf32>
    %9 = vector.shape_cast %8 : vector<1x128x128xf32> to vector<128x128xf32>
    %cst_16 = arith.constant dense<0.000000e+00> : vector<32x128xf32>
    %10 = tpu.matmul %7, %9, %cst_16 {dimension_numbers = #tpu.dot_dimension_numbers<[1], [0], [0], [1], [0, 0, 1, 1], [], []>} : vector<32x128xf32>, vector<128x128xf32>, vector<32x128xf32> -> vector<32x128xf32>
    %11 = arith.addf %5, %10 : vector<32x128xf32>
    %c0_17 = arith.constant 0 : index
    %c1_18 = arith.constant 1 : index
    %c0_19 = arith.constant 0 : index
    %12 = vector.load %arg7[%c0_17, %c1_18, %c0_19] : memref<2x18x128xf32, #tpu.memory_space<vmem>>, vector<2x16x128xf32>
    %13 = vector.shape_cast %12 : vector<2x16x128xf32> to vector<32x128xf32>
    %c1_20 = arith.constant 1 : index
    %c0_21 = arith.constant 0 : index
    %c0_22 = arith.constant 0 : index
    %14 = vector.load %arg2[%c1_20, %c0_21, %c0_22] : memref<3x128x128xf32, #tpu.memory_space<vmem>>, vector<1x128x128xf32>
    %15 = vector.shape_cast %14 : vector<1x128x128xf32> to vector<128x128xf32>
    %cst_23 = arith.constant dense<0.000000e+00> : vector<32x128xf32>
    %16 = tpu.matmul %13, %15, %cst_23 {dimension_numbers = #tpu.dot_dimension_numbers<[1], [0], [0], [1], [0, 0, 1, 1], [], []>} : vector<32x128xf32>, vector<128x128xf32>, vector<32x128xf32> -> vector<32x128xf32>
    %17 = arith.addf %11, %16 : vector<32x128xf32>
    %c0_24 = arith.constant 0 : index
    %c2 = arith.constant 2 : index
    %c0_25 = arith.constant 0 : index
    %18 = vector.load %arg7[%c0_24, %c2, %c0_25] : memref<2x18x128xf32, #tpu.memory_space<vmem>>, vector<2x16x128xf32>
    %19 = vector.shape_cast %18 : vector<2x16x128xf32> to vector<32x128xf32>
    %c2_26 = arith.constant 2 : index
    %c0_27 = arith.constant 0 : index
    %c0_28 = arith.constant 0 : index
    %20 = vector.load %arg2[%c2_26, %c0_27, %c0_28] : memref<3x128x128xf32, #tpu.memory_space<vmem>>, vector<1x128x128xf32>
    %21 = vector.shape_cast %20 : vector<1x128x128xf32> to vector<128x128xf32>
    %cst_29 = arith.constant dense<0.000000e+00> : vector<32x128xf32>
    %22 = tpu.matmul %19, %21, %cst_29 {dimension_numbers = #tpu.dot_dimension_numbers<[1], [0], [0], [1], [0, 0, 1, 1], [], []>} : vector<32x128xf32>, vector<128x128xf32>, vector<32x128xf32> -> vector<32x128xf32>
    %23 = arith.addf %17, %22 : vector<32x128xf32>
    %c0_30 = arith.constant 0 : index
    %c0_31 = arith.constant 0 : index
    %24 = vector.load %arg4[%c0_30, %c0_31] : memref<1x128xf32, #tpu.memory_space<vmem>>, vector<1x128xf32>
    %25 = vector.broadcast %24 : vector<1x128xf32> to vector<32x128xf32>
    %26 = arith.addf %23, %25 : vector<32x128xf32>
    %cst_32 = arith.constant 0.000000e+00 : f32
    %27 = vector.broadcast %cst_32 : f32 to vector<32x128xf32>
    %28 = arith.maximumf %26, %27 : vector<32x128xf32>
    %29 = vector.shape_cast %28 : vector<32x128xf32> to vector<2x16x128xf32>
    %c0_33 = arith.constant 0 : index
    %c1_34 = arith.constant 1 : index
    %c0_35 = arith.constant 0 : index
    %30 = vector.load %arg7[%c0_33, %c1_34, %c0_35] : memref<2x18x128xf32, #tpu.memory_space<vmem>>, vector<2x16x128xf32>
    tpu.vector_store %arg7[%c0_33, %c1_34, %c0_35], %29 {strides = array<i32>} : memref<2x18x128xf32, #tpu.memory_space<vmem>>, vector<2x16x128xf32>,
    %cst_36 = arith.constant 0.000000e+00 : f32
    %31 = vector.broadcast %cst_36 : f32 to vector<32x128xf32>
    %c0_37 = arith.constant 0 : index
    %c0_38 = arith.constant 0 : index
    %c0_39 = arith.constant 0 : index
    %32 = vector.load %arg7[%c0_37, %c0_38, %c0_39] : memref<2x18x128xf32, #tpu.memory_space<vmem>>, vector<2x16x128xf32>
    %33 = vector.shape_cast %32 : vector<2x16x128xf32> to vector<32x128xf32>
    %c0_40 = arith.constant 0 : index
    %c0_41 = arith.constant 0 : index
    %c0_42 = arith.constant 0 : index
    %34 = vector.load %arg3[%c0_40, %c0_41, %c0_42] : memref<3x128x128xf32, #tpu.memory_space<vmem>>, vector<1x128x128xf32>
    %35 = vector.shape_cast %34 : vector<1x128x128xf32> to vector<128x128xf32>
    %cst_43 = arith.constant dense<0.000000e+00> : vector<32x128xf32>
    %36 = tpu.matmul %33, %35, %cst_43 {dimension_numbers = #tpu.dot_dimension_numbers<[1], [0], [0], [1], [0, 0, 1, 1], [], []>} : vector<32x128xf32>, vector<128x128xf32>, vector<32x128xf32> -> vector<32x128xf32>
    %37 = arith.addf %31, %36 : vector<32x128xf32>
    %c0_44 = arith.constant 0 : index
    %c1_45 = arith.constant 1 : index
    %c0_46 = arith.constant 0 : index
    %38 = vector.load %arg7[%c0_44, %c1_45, %c0_46] : memref<2x18x128xf32, #tpu.memory_space<vmem>>, vector<2x16x128xf32>
    %39 = vector.shape_cast %38 : vector<2x16x128xf32> to vector<32x128xf32>
    %c1_47 = arith.constant 1 : index
    %c0_48 = arith.constant 0 : index
    %c0_49 = arith.constant 0 : index
    %40 = vector.load %arg3[%c1_47, %c0_48, %c0_49] : memref<3x128x128xf32, #tpu.memory_space<vmem>>, vector<1x128x128xf32>
    %41 = vector.shape_cast %40 : vector<1x128x128xf32> to vector<128x128xf32>
    %cst_50 = arith.constant dense<0.000000e+00> : vector<32x128xf32>
    %42 = tpu.matmul %39, %41, %cst_50 {dimension_numbers = #tpu.dot_dimension_numbers<[1], [0], [0], [1], [0, 0, 1, 1], [], []>} : vector<32x128xf32>, vector<128x128xf32>, vector<32x128xf32> -> vector<32x128xf32>
    %43 = arith.addf %37, %42 : vector<32x128xf32>
    %c0_51 = arith.constant 0 : index
    %c2_52 = arith.constant 2 : index
    %c0_53 = arith.constant 0 : index
    %44 = vector.load %arg7[%c0_51, %c2_52, %c0_53] : memref<2x18x128xf32, #tpu.memory_space<vmem>>, vector<2x16x128xf32>
    %45 = vector.shape_cast %44 : vector<2x16x128xf32> to vector<32x128xf32>
    %c2_54 = arith.constant 2 : index
    %c0_55 = arith.constant 0 : index
    %c0_56 = arith.constant 0 : index
    %46 = vector.load %arg3[%c2_54, %c0_55, %c0_56] : memref<3x128x128xf32, #tpu.memory_space<vmem>>, vector<1x128x128xf32>
    %47 = vector.shape_cast %46 : vector<1x128x128xf32> to vector<128x128xf32>
    %cst_57 = arith.constant dense<0.000000e+00> : vector<32x128xf32>
    %48 = tpu.matmul %45, %47, %cst_57 {dimension_numbers = #tpu.dot_dimension_numbers<[1], [0], [0], [1], [0, 0, 1, 1], [], []>} : vector<32x128xf32>, vector<128x128xf32>, vector<32x128xf32> -> vector<32x128xf32>
    %49 = arith.addf %43, %48 : vector<32x128xf32>
    %c0_58 = arith.constant 0 : index
    %c0_59 = arith.constant 0 : index
    %50 = vector.load %arg5[%c0_58, %c0_59] : memref<1x128xf32, #tpu.memory_space<vmem>>, vector<1x128xf32>
    %51 = vector.broadcast %50 : vector<1x128xf32> to vector<32x128xf32>
    %52 = arith.addf %49, %51 : vector<32x128xf32>
    %c0_60 = arith.constant 0 : index
    %c0_61 = arith.constant 0 : index
    %c0_62 = arith.constant 0 : index
    %53 = vector.load %arg1[%c0_60, %c0_61, %c0_62] : memref<2x16x128xf32, #tpu.memory_space<vmem>>, vector<2x16x128xf32>
    %54 = vector.shape_cast %53 : vector<2x16x128xf32> to vector<32x128xf32>
    %55 = arith.addf %54, %52 : vector<32x128xf32>
    %cst_63 = arith.constant 0.000000e+00 : f32
    %56 = vector.broadcast %cst_63 : f32 to vector<32x128xf32>
    %57 = arith.maximumf %55, %56 : vector<32x128xf32>
    %58 = vector.shape_cast %57 : vector<32x128xf32> to vector<2x16x128xf32>
    %c0_64 = arith.constant 0 : index
    %c0_65 = arith.constant 0 : index
    %c0_66 = arith.constant 0 : index
    %59 = vector.load %arg6[%c0_64, %c0_65, %c0_66] : memref<2x16x128xf32, #tpu.memory_space<vmem>>, vector<2x16x128xf32>
    tpu.vector_store %arg6[%c0_64, %c0_65, %c0_66], %58 {strides = array<i32>} : memref<2x16x128xf32, #tpu.memory_space<vmem>>, vector<2x16x128xf32>,
    return
  }
  func.func @transform_0(%arg0: i32) -> (i32, i32, i32) {
    %c0_i32 = arith.constant 0 : i32
    %c0_i32_0 = arith.constant 0 : i32
    %c0_i32_1 = arith.constant 0 : i32
    %c0_i32_2 = arith.constant 0 : i32
    return %c0_i32, %c0_i32_0, %c0_i32_1 : i32, i32, i32
  }
  func.func @transform_1(%arg0: i32) -> (i32, i32, i32) {
    %c0_i32 = arith.constant 0 : i32
    %c0_i32_0 = arith.constant 0 : i32
    %c0_i32_1 = arith.constant 0 : i32
    %c0_i32_2 = arith.constant 0 : i32
    return %c0_i32, %c0_i32_0, %c0_i32_1 : i32, i32, i32
  }
  func.func @transform_2(%arg0: i32) -> (i32, i32, i32) {
    %c0_i32 = arith.constant 0 : i32
    %c0_i32_0 = arith.constant 0 : i32
    %c0_i32_1 = arith.constant 0 : i32
    %c0_i32_2 = arith.constant 0 : i32
    return %c0_i32, %c0_i32_0, %c0_i32_1 : i32, i32, i32
  }
  func.func @transform_3(%arg0: i32) -> (i32, i32) {
    %c0_i32 = arith.constant 0 : i32
    %c0_i32_0 = arith.constant 0 : i32
    %c0_i32_1 = arith.constant 0 : i32
    return %c0_i32, %c0_i32_0 : i32, i32
  }
  func.func @transform_4(%arg0: i32) -> (i32, i32) {
    %c0_i32 = arith.constant 0 : i32
    %c0_i32_0 = arith.constant 0 : i32
    %c0_i32_1 = arith.constant 0 : i32
    return %c0_i32, %c0_i32_0 : i32, i32
  }
  func.func @transform_5(%arg0: i32) -> (i32, i32, i32) {
    %c0_i32 = arith.constant 0 : i32
    %c0_i32_0 = arith.constant 0 : i32
    %c0_i32_1 = arith.constant 0 : i32
    %c0_i32_2 = arith.constant 0 : i32
    return %c0_i32, %c0_i32_0, %c0_i32_1 : i32, i32, i32
  }
}

</mosaic_0001>

<llo_original>
// kernel: tpu_custom_call.1
$region0: #{tpu_custom_call.1}
  #allocation0 [shape = 'u32[]', space=smem, size = 0x4, offset = 0x4, fixed_abs, tag = 'smem constant byte address 0x4 - core index']
  #allocation1 [shape = 'u32[72,128]{1,0:T(1,128)}', space=vmem, size = 0x9000, scoped, tag = 'internal scratch']
  #allocation2 [shape = 'f32[2,18,128]{2,1,0:T(8,128)}', space=vmem, size = 0x6000, scoped, tag = 'scratch operand']
  %s0 = inlined_call_operand.hbm [shape: f32[2,16,128], index: 0, kind: input, shape index: {}]
  %s1 = inlined_call_operand.hbm [shape: f32[3,128,128], index: 1, kind: input, shape index: {}]
  %s2 = inlined_call_operand.hbm [shape: f32[3,128,128], index: 2, kind: input, shape index: {}]
  %s3 = inlined_call_operand.vmem [shape: f32[1,128], index: 3, kind: input, shape index: {}]
  %s4 = inlined_call_operand.vmem [shape: f32[1,128], index: 4, kind: input, shape index: {}]
  %s5 = inlined_call_operand.hbm [shape: f32[2,16,128], index: 5, kind: output, shape index: {}]
  %s6 = sld [smem:[#allocation0]]
  $region42: #{tpu_custom_call.1} parent=0
    _
  %s8 = ssub.s32 1, %s6
  %s9 = scalar_select 0, %s8, %s6
  $region1: #{tpu_custom_call.1} parent=0
    #allocation3 [shape = 'u8[16384]{0}', space=vmem, size = 0x4000, scoped, tag = 'input window, operand 0, single buffered']
    #allocation4 [shape = 's32[1]{0}', space=sflag, size = 0x4, scoped, tag = 'scoped memory for tpu_custom_call.1']
    #allocation5 [shape = 's32[1]{0}', space=sflag, size = 0x4, scoped, tag = 'scoped memory for tpu_custom_call.1']
    #allocation6 [shape = 'u8[196608]{0}', space=vmem, size = 0x30000, scoped, tag = 'input window, operand 1, single buffered']
    #allocation7 [shape = 's32[1]{0}', space=sflag, size = 0x4, scoped, tag = 'scoped memory for tpu_custom_call.1']
    #allocation8 [shape = 'u8[196608]{0}', space=vmem, size = 0x30000, scoped, tag = 'input window, operand 2, single buffered']
    #allocation9 [shape = 'u8[16384]{0}', space=vmem, size = 0x4000, scoped, tag = 'output window, operand 0, single buffered']
    %10 = vsyncpa [#allocation4], 0
    %11 = vsyncpa [#allocation7], 0
    %12 = vsyncpa [#allocation5], 0
    // Predicated region
    $region2: #{tpu_custom_call.1} parent=1 // pred_check
      _
    $region3: #{tpu_custom_call.1} parent=1 // pred_check_branch
      %14 = sbr.rel (0) target = $region5
    $region4: #{tpu_custom_call.1} parent=1 // pred_region
      %16 = vsyncadd [#allocation4], 0
      %s17 = sshll.u32 %s0, 4
      %s18 = int_to_ptr.hbm [resolvable:$true] %s17
      %s19 = sshll.u32 [#allocation3], 4
      %s20 = int_to_ptr.vmem [resolvable:$true] %s19
      %25 = dma.hbm_to_vmem [thread:$0]  %s18, 512, %s20, [#allocation4], 128, 128, 8
    $region5: #{tpu_custom_call.1} parent=1 // pred_fallthru
      _
    // Predicated region
    $region6: #{tpu_custom_call.1} parent=1 // pred_check
      _
    $region7: #{tpu_custom_call.1} parent=1 // pred_check_branch
      %27 = sbr.rel (0) target = $region9
    $region8: #{tpu_custom_call.1} parent=1 // pred_region
      %29 = vsyncadd [#allocation7], 0
      %s30 = sshll.u32 %s1, 4
      %s31 = int_to_ptr.hbm [resolvable:$true] %s30
      %s32 = sshll.u32 [#allocation6], 4
      %s33 = int_to_ptr.vmem [resolvable:$true] %s32
      %38 = dma.hbm_to_vmem [thread:$0]  %s31, 6144, %s33, [#allocation7], 128, 128, 8
    $region9: #{tpu_custom_call.1} parent=1 // pred_fallthru
      _
    // Predicated region
    $region10: #{tpu_custom_call.1} parent=1 // pred_check
      _
    $region11: #{tpu_custom_call.1} parent=1 // pred_check_branch
      %40 = sbr.rel (0) target = $region13
    $region12: #{tpu_custom_call.1} parent=1 // pred_region
      %42 = vsyncadd [#allocation7], 0
      %s43 = sshll.u32 %s2, 4
      %s44 = int_to_ptr.hbm [resolvable:$true] %s43
      %s45 = sshll.u32 [#allocation8], 4
      %s46 = int_to_ptr.vmem [resolvable:$true] %s45
      %51 = dma.hbm_to_vmem [thread:$0]  %s44, 6144, %s46, [#allocation7], 128, 128, 8
    $region13: #{tpu_custom_call.1} parent=1 // pred_fallthru
      _
    // Predicated region
    $region14: #{tpu_custom_call.1} parent=1 // pred_check
      _
    $region15: #{tpu_custom_call.1} parent=1 // pred_check_branch
      %53 = sbr.rel (0) target = $region17
    $region16: #{tpu_custom_call.1} parent=1 // pred_region
      _
    $region17: #{tpu_custom_call.1} parent=1 // pred_fallthru
      _
    // Predicated region
    $region18: #{tpu_custom_call.1} parent=1 // pred_check
      _
    $region19: #{tpu_custom_call.1} parent=1 // pred_check_branch
      %55 = sbr.rel (0) target = $region21
    $region20: #{tpu_custom_call.1} parent=1 // pred_region
      _
    $region21: #{tpu_custom_call.1} parent=1 // pred_fallthru
      _
    // Predicated region
    $region22: #{tpu_custom_call.1} parent=1 // pred_check
      _
    $region23: #{tpu_custom_call.1} parent=1 // pred_check_branch
      %57 = sbr.rel (0) target = $region25
    $region24: #{tpu_custom_call.1} parent=1 // pred_region
      %59 = dma.done [#allocation4], 512
    $region25: #{tpu_custom_call.1} parent=1 // pred_fallthru
      _
    // Predicated region
    $region26: #{tpu_custom_call.1} parent=1 // pred_check
      _
    $region27: #{tpu_custom_call.1} parent=1 // pred_check_branch
      %61 = sbr.rel (0) target = $region29
    $region28: #{tpu_custom_call.1} parent=1 // pred_region
      %63 = dma.done [#allocation7], 6144
    $region29: #{tpu_custom_call.1} parent=1 // pred_fallthru
      _
    // Predicated region
    $region30: #{tpu_custom_call.1} parent=1 // pred_check
      _
    $region31: #{tpu_custom_call.1} parent=1 // pred_check_branch
      %65 = sbr.rel (0) target = $region33
    $region32: #{tpu_custom_call.1} parent=1 // pred_region
      %67 = dma.done [#allocation7], 6144
    $region33: #{tpu_custom_call.1} parent=1 // pred_fallthru
      _
    %68 = vst [vmem:[#allocation2] sm:$0x1] 0.0
    %69 = vst [vmem:[#allocation2 + $0x18] sm:$0x1] 0.0
    %70 = vst [vmem:[#allocation2 + $0x11] sm:$0x1] 0.0
    %71 = vst [vmem:[#allocation2 + $0x29] sm:$0x1] 0.0
    %v72 = vld [vmem:[#allocation3] sm:$0xff]
    %v73 = vld [vmem:[#allocation3 + $0x8] sm:$0xff]
    %v74 = vld [vmem:[#allocation3 + $0x10] sm:$0xff]
    %v75 = vld [vmem:[#allocation3 + $0x18] sm:$0xff]
    %76 = vst [vmem:[#allocation2 + $0x1] sm:$0xff] %v72
    %77 = vst [vmem:[#allocation2 + $0x9] sm:$0xff] %v73
    %78 = vst [vmem:[#allocation2 + $0x19] sm:$0xff] %v74
    %79 = vst [vmem:[#allocation2 + $0x21] sm:$0xff] %v75
    %v80 = vld [vmem:[#allocation2] sm:$0xff]
    %v81 = vld [vmem:[#allocation2 + $0x8] sm:$0xff]
    %v82 = vld [vmem:[#allocation2 + $0x18] sm:$0xff]
    %v83 = vld [vmem:[#allocation2 + $0x20] sm:$0xff]
    %v84 = vld [vmem:[#allocation6] sm:$0xff]
    %v85 = vld [vmem:[#allocation6 + $0x8] sm:$0xff]
    %v86 = vld [vmem:[#allocation6 + $0x10] sm:$0xff]
    %v87 = vld [vmem:[#allocation6 + $0x18] sm:$0xff]
    %v88 = vld [vmem:[#allocation6 + $0x20] sm:$0xff]
    %v89 = vld [vmem:[#allocation6 + $0x28] sm:$0xff]
    %v90 = vld [vmem:[#allocation6 + $0x30] sm:$0xff]
    %v91 = vld [vmem:[#allocation6 + $0x38] sm:$0xff]
    %v92 = vld [vmem:[#allocation6 + $0x40] sm:$0xff]
    %v93 = vld [vmem:[#allocation6 + $0x48] sm:$0xff]
    %v94 = vld [vmem:[#allocation6 + $0x50] sm:$0xff]
    %v95 = vld [vmem:[#allocation6 + $0x58] sm:$0xff]
    %v96 = vld [vmem:[#allocation6 + $0x60] sm:$0xff]
    %v97 = vld [vmem:[#allocation6 + $0x68] sm:$0xff]
    %v98 = vld [vmem:[#allocation6 + $0x70] sm:$0xff]
    %v99 = vld [vmem:[#allocation6 + $0x78] sm:$0xff]
    %v100 = vld [vmem:[#allocation2 + $0x1] sm:$0xff]
    %v101 = vld [vmem:[#allocation2 + $0x9] sm:$0xff]
    %v102 = vld [vmem:[#allocation2 + $0x19] sm:$0xff]
    %v103 = vld [vmem:[#allocation2 + $0x21] sm:$0xff]
    %s104 = scalar_lea.vmem [#allocation6], 128
    %v105 = vld [vmem:[%s104] sm:$0xff]
    %v106 = vld [vmem:[%s104 + $0x8] sm:$0xff]
    %v107 = vld [vmem:[%s104 + $0x10] sm:$0xff]
    %v108 = vld [vmem:[%s104 + $0x18] sm:$0xff]
    %v109 = vld [vmem:[%s104 + $0x20] sm:$0xff]
    %v110 = vld [vmem:[%s104 + $0x28] sm:$0xff]
    %v111 = vld [vmem:[%s104 + $0x30] sm:$0xff]
    %v112 = vld [vmem:[%s104 + $0x38] sm:$0xff]
    %v113 = vld [vmem:[%s104 + $0x40] sm:$0xff]
    %v114 = vld [vmem:[%s104 + $0x48] sm:$0xff]
    %v115 = vld [vmem:[%s104 + $0x50] sm:$0xff]
    %v116 = vld [vmem:[%s104 + $0x58] sm:$0xff]
    %v117 = vld [vmem:[%s104 + $0x60] sm:$0xff]
    %v118 = vld [vmem:[%s104 + $0x68] sm:$0xff]
    %v119 = vld [vmem:[%s104 + $0x70] sm:$0xff]
    %v120 = vld [vmem:[%s104 + $0x78] sm:$0xff]
    %121 = vmatpush.msra.mxu0 %v120
    %122 = vmatpush.msra.mxu0 %v119
    %123 = vmatpush.msra.mxu0 %v118
    %124 = vmatpush.msra.mxu0 %v117
    %125 = vmatpush.msra.mxu0 %v116
    %126 = vmatpush.msra.mxu0 %v115
    %127 = vmatpush.msra.mxu0 %v114
    %128 = vmatpush.msra.mxu0 %v113
    %129 = vmatpush.msra.mxu0 %v112
    %130 = vmatpush.msra.mxu0 %v111
    %131 = vmatpush.msra.mxu0 %v110
    %132 = vmatpush.msra.mxu0 %v109
    %133 = vmatpush.msra.mxu0 %v108
    %134 = vmatpush.msra.mxu0 %v107
    %135 = vmatpush.msra.mxu0 %v106
    %136 = vmatpush.msra.mxu0 %v105
    %137 = vmatmul.f32.gmra.mxu0 %v100
    %v138 = vpop.f32.mrf.mxu0
    %v139 = vadd.f32 0.0, %v138
    %140 = vmatmul.f32.gmra.mxu0 %v101
    %v141 = vpop.f32.mrf.mxu0
    %v142 = vadd.f32 0.0, %v141
    %143 = vmatmul.f32.gmra.mxu0 %v102
    %v144 = vpop.f32.mrf.mxu0
    %v145 = vadd.f32 0.0, %v144
    %146 = vmatmul.f32.gmra.mxu0 %v103
    %v147 = vpop.f32.mrf.mxu0
    %v148 = vadd.f32 0.0, %v147
    %149 = vdwg.mxu0
    %150 = vmatpush.msra.mxu0 %v99
    %151 = vmatpush.msra.mxu0 %v98
    %152 = vmatpush.msra.mxu0 %v97
    %153 = vmatpush.msra.mxu0 %v96
    %154 = vmatpush.msra.mxu0 %v95
    %155 = vmatpush.msra.mxu0 %v94
    %156 = vmatpush.msra.mxu0 %v93
    %157 = vmatpush.msra.mxu0 %v92
    %158 = vmatpush.msra.mxu0 %v91
    %159 = vmatpush.msra.mxu0 %v90
    %160 = vmatpush.msra.mxu0 %v89
    %161 = vmatpush.msra.mxu0 %v88
    %162 = vmatpush.msra.mxu0 %v87
    %163 = vmatpush.msra.mxu0 %v86
    %164 = vmatpush.msra.mxu0 %v85
    %165 = vmatpush.msra.mxu0 %v84
    %166 = vmatmul.f32.gmra.mxu0 %v80
    %v167 = vpop.f32.mrf.mxu0
    %v168 = vadd.f32 %v139, %v167
    %169 = vmatmul.f32.gmra.mxu0 %v81
    %v170 = vpop.f32.mrf.mxu0
    %v171 = vadd.f32 %v142, %v170
    %172 = vmatmul.f32.gmra.mxu0 %v82
    %v173 = vpop.f32.mrf.mxu0
    %v174 = vadd.f32 %v145, %v173
    %175 = vmatmul.f32.gmra.mxu0 %v83
    %v176 = vpop.f32.mrf.mxu0
    %v177 = vadd.f32 %v148, %v176
    %178 = vdwg.mxu0
    %v179 = vld [vmem:[#allocation2 + $0x2] sm:$0xff]
    %v180 = vld [vmem:[#allocation2 + $0xa] sm:$0xff]
    %v181 = vld [vmem:[#allocation2 + $0x1a] sm:$0xff]
    %v182 = vld [vmem:[#allocation2 + $0x22] sm:$0xff]
    %s183 = scalar_lea.vmem [#allocation6], 256
    %v184 = vld [vmem:[%s183] sm:$0xff]
    %v185 = vld [vmem:[%s183 + $0x8] sm:$0xff]
    %v186 = vld [vmem:[%s183 + $0x10] sm:$0xff]
    %v187 = vld [vmem:[%s183 + $0x18] sm:$0xff]
    %v188 = vld [vmem:[%s183 + $0x20] sm:$0xff]
    %v189 = vld [vmem:[%s183 + $0x28] sm:$0xff]
    %v190 = vld [vmem:[%s183 + $0x30] sm:$0xff]
    %v191 = vld [vmem:[%s183 + $0x38] sm:$0xff]
    %v192 = vld [vmem:[%s183 + $0x40] sm:$0xff]
    %v193 = vld [vmem:[%s183 + $0x48] sm:$0xff]
    %v194 = vld [vmem:[%s183 + $0x50] sm:$0xff]
    %v195 = vld [vmem:[%s183 + $0x58] sm:$0xff]
    %v196 = vld [vmem:[%s183 + $0x60] sm:$0xff]
    %v197 = vld [vmem:[%s183 + $0x68] sm:$0xff]
    %v198 = vld [vmem:[%s183 + $0x70] sm:$0xff]
    %v199 = vld [vmem:[%s183 + $0x78] sm:$0xff]
    %200 = vmatpush.msra.mxu0 %v199
    %201 = vmatpush.msra.mxu0 %v198
    %202 = vmatpush.msra.mxu0 %v197
    %203 = vmatpush.msra.mxu0 %v196
    %204 = vmatpush.msra.mxu0 %v195
    %205 = vmatpush.msra.mxu0 %v194
    %206 = vmatpush.msra.mxu0 %v193
    %207 = vmatpush.msra.mxu0 %v192
    %208 = vmatpush.msra.mxu0 %v191
    %209 = vmatpush.msra.mxu0 %v190
    %210 = vmatpush.msra.mxu0 %v189
    %211 = vmatpush.msra.mxu0 %v188
    %212 = vmatpush.msra.mxu0 %v187
    %213 = vmatpush.msra.mxu0 %v186
    %214 = vmatpush.msra.mxu0 %v185
    %215 = vmatpush.msra.mxu0 %v184
    %216 = vmatmul.f32.gmra.mxu0 %v179
    %v217 = vpop.f32.mrf.mxu0
    %v218 = vadd.f32 0.0, %v217
    %219 = vmatmul.f32.gmra.mxu0 %v180
    %v220 = vpop.f32.mrf.mxu0
    %v221 = vadd.f32 0.0, %v220
    %222 = vmatmul.f32.gmra.mxu0 %v181
    %v223 = vpop.f32.mrf.mxu0
    %v224 = vadd.f32 0.0, %v223
    %225 = vmatmul.f32.gmra.mxu0 %v182
    %v226 = vpop.f32.mrf.mxu0
    %v227 = vadd.f32 0.0, %v226
    %228 = vdwg.mxu0
    %v229 = vadd.f32 %v168, %v218
    %v230 = vadd.f32 %v171, %v221
    %v231 = vadd.f32 %v174, %v224
    %v232 = vadd.f32 %v177, %v227
    %v233 = vld [vmem:[%s3] sm:$0x1]
    %v235 = vperm.slane %v233, 0
    %v237 = vadd.f32 %v229, %v235
    %v238 = vadd.f32 %v230, %v235
    %v239 = vadd.f32 %v231, %v235
    %v240 = vadd.f32 %v232, %v235
    %v241 = vmax.f32 %v237, 0.0
    %v242 = vmax.f32 %v238, 0.0
    %v243 = vmax.f32 %v239, 0.0
    %v244 = vmax.f32 %v240, 0.0
    %245 = vst [vmem:[#allocation2 + $0x1] sm:$0xff] %v241
    %246 = vst [vmem:[#allocation2 + $0x9] sm:$0xff] %v242
    %247 = vst [vmem:[#allocation2 + $0x19] sm:$0xff] %v243
    %248 = vst [vmem:[#allocation2 + $0x21] sm:$0xff] %v244
    %v249 = vld [vmem:[#allocation2] sm:$0xff]
    %v250 = vld [vmem:[#allocation2 + $0x8] sm:$0xff]
    %v251 = vld [vmem:[#allocation2 + $0x18] sm:$0xff]
    %v252 = vld [vmem:[#allocation2 + $0x20] sm:$0xff]
    %v253 = vld [vmem:[#allocation8] sm:$0xff]
    %v254 = vld [vmem:[#allocation8 + $0x8] sm:$0xff]
    %v255 = vld [vmem:[#allocation8 + $0x10] sm:$0xff]
    %v256 = vld [vmem:[#allocation8 + $0x18] sm:$0xff]
    %v257 = vld [vmem:[#allocation8 + $0x20] sm:$0xff]
    %v258 = vld [vmem:[#allocation8 + $0x28] sm:$0xff]
    %v259 = vld [vmem:[#allocation8 + $0x30] sm:$0xff]
    %v260 = vld [vmem:[#allocation8 + $0x38] sm:$0xff]
    %v261 = vld [vmem:[#allocation8 + $0x40] sm:$0xff]
    %v262 = vld [vmem:[#allocation8 + $0x48] sm:$0xff]
    %v263 = vld [vmem:[#allocation8 + $0x50] sm:$0xff]
    %v264 = vld [vmem:[#allocation8 + $0x58] sm:$0xff]
    %v265 = vld [vmem:[#allocation8 + $0x60] sm:$0xff]
    %v266 = vld [vmem:[#allocation8 + $0x68] sm:$0xff]
    %v267 = vld [vmem:[#allocation8 + $0x70] sm:$0xff]
    %v268 = vld [vmem:[#allocation8 + $0x78] sm:$0xff]
    %v269 = vld [vmem:[#allocation2 + $0x1] sm:$0xff]
    %v270 = vld [vmem:[#allocation2 + $0x9] sm:$0xff]
    %v271 = vld [vmem:[#allocation2 + $0x19] sm:$0xff]
    %v272 = vld [vmem:[#allocation2 + $0x21] sm:$0xff]
    %s273 = scalar_lea.vmem [#allocation8], 128
    %v274 = vld [vmem:[%s273] sm:$0xff]
    %v275 = vld [vmem:[%s273 + $0x8] sm:$0xff]
    %v276 = vld [vmem:[%s273 + $0x10] sm:$0xff]
    %v277 = vld [vmem:[%s273 + $0x18] sm:$0xff]
    %v278 = vld [vmem:[%s273 + $0x20] sm:$0xff]
    %v279 = vld [vmem:[%s273 + $0x28] sm:$0xff]
    %v280 = vld [vmem:[%s273 + $0x30] sm:$0xff]
    %v281 = vld [vmem:[%s273 + $0x38] sm:$0xff]
    %v282 = vld [vmem:[%s273 + $0x40] sm:$0xff]
    %v283 = vld [vmem:[%s273 + $0x48] sm:$0xff]
    %v284 = vld [vmem:[%s273 + $0x50] sm:$0xff]
    %v285 = vld [vmem:[%s273 + $0x58] sm:$0xff]
    %v286 = vld [vmem:[%s273 + $0x60] sm:$0xff]
    %v287 = vld [vmem:[%s273 + $0x68] sm:$0xff]
    %v288 = vld [vmem:[%s273 + $0x70] sm:$0xff]
    %v289 = vld [vmem:[%s273 + $0x78] sm:$0xff]
    %290 = vmatpush.msra.mxu0 %v289
    %291 = vmatpush.msra.mxu0 %v288
    %292 = vmatpush.msra.mxu0 %v287
    %293 = vmatpush.msra.mxu0 %v286
    %294 = vmatpush.msra.mxu0 %v285
    %295 = vmatpush.msra.mxu0 %v284
    %296 = vmatpush.msra.mxu0 %v283
    %297 = vmatpush.msra.mxu0 %v282
    %298 = vmatpush.msra.mxu0 %v281
    %299 = vmatpush.msra.mxu0 %v280
    %300 = vmatpush.msra.mxu0 %v279
    %301 = vmatpush.msra.mxu0 %v278
    %302 = vmatpush.msra.mxu0 %v277
    %303 = vmatpush.msra.mxu0 %v276
    %304 = vmatpush.msra.mxu0 %v275
    %305 = vmatpush.msra.mxu0 %v274
    %306 = vmatmul.f32.gmra.mxu0 %v269
    %v307 = vpop.f32.mrf.mxu0
    %v308 = vadd.f32 0.0, %v307
    %309 = vmatmul.f32.gmra.mxu0 %v270
    %v310 = vpop.f32.mrf.mxu0
    %v311 = vadd.f32 0.0, %v310
    %312 = vmatmul.f32.gmra.mxu0 %v271
    %v313 = vpop.f32.mrf.mxu0
    %v314 = vadd.f32 0.0, %v313
    %315 = vmatmul.f32.gmra.mxu0 %v272
    %v316 = vpop.f32.mrf.mxu0
    %v317 = vadd.f32 0.0, %v316
    %318 = vdwg.mxu0
    %319 = vmatpush.msra.mxu0 %v268
    %320 = vmatpush.msra.mxu0 %v267
    %321 = vmatpush.msra.mxu0 %v266
    %322 = vmatpush.msra.mxu0 %v265
    %323 = vmatpush.msra.mxu0 %v264
    %324 = vmatpush.msra.mxu0 %v263
    %325 = vmatpush.msra.mxu0 %v262
    %326 = vmatpush.msra.mxu0 %v261
    %327 = vmatpush.msra.mxu0 %v260
    %328 = vmatpush.msra.mxu0 %v259
    %329 = vmatpush.msra.mxu0 %v258
    %330 = vmatpush.msra.mxu0 %v257
    %331 = vmatpush.msra.mxu0 %v256
    %332 = vmatpush.msra.mxu0 %v255
    %333 = vmatpush.msra.mxu0 %v254
    %334 = vmatpush.msra.mxu0 %v253
    %335 = vmatmul.f32.gmra.mxu0 %v249
    %v336 = vpop.f32.mrf.mxu0
    %v337 = vadd.f32 %v308, %v336
    %338 = vmatmul.f32.gmra.mxu0 %v250
    %v339 = vpop.f32.mrf.mxu0
    %v340 = vadd.f32 %v311, %v339
    %341 = vmatmul.f32.gmra.mxu0 %v251
    %v342 = vpop.f32.mrf.mxu0
    %v343 = vadd.f32 %v314, %v342
    %344 = vmatmul.f32.gmra.mxu0 %v252
    %v345 = vpop.f32.mrf.mxu0
    %v346 = vadd.f32 %v317, %v345
    %347 = vdwg.mxu0
    %v348 = vld [vmem:[#allocation2 + $0x2] sm:$0xff]
    %v349 = vld [vmem:[#allocation2 + $0xa] sm:$0xff]
    %v350 = vld [vmem:[#allocation2 + $0x1a] sm:$0xff]
    %v351 = vld [vmem:[#allocation2 + $0x22] sm:$0xff]
    %s352 = scalar_lea.vmem [#allocation8], 256
    %v353 = vld [vmem:[%s352] sm:$0xff]
    %v354 = vld [vmem:[%s352 + $0x8] sm:$0xff]
    %v355 = vld [vmem:[%s352 + $0x10] sm:$0xff]
    %v356 = vld [vmem:[%s352 + $0x18] sm:$0xff]
    %v357 = vld [vmem:[%s352 + $0x20] sm:$0xff]
    %v358 = vld [vmem:[%s352 + $0x28] sm:$0xff]
    %v359 = vld [vmem:[%s352 + $0x30] sm:$0xff]
    %v360 = vld [vmem:[%s352 + $0x38] sm:$0xff]
    %v361 = vld [vmem:[%s352 + $0x40] sm:$0xff]
    %v362 = vld [vmem:[%s352 + $0x48] sm:$0xff]
    %v363 = vld [vmem:[%s352 + $0x50] sm:$0xff]
    %v364 = vld [vmem:[%s352 + $0x58] sm:$0xff]
    %v365 = vld [vmem:[%s352 + $0x60] sm:$0xff]
    %v366 = vld [vmem:[%s352 + $0x68] sm:$0xff]
    %v367 = vld [vmem:[%s352 + $0x70] sm:$0xff]
    %v368 = vld [vmem:[%s352 + $0x78] sm:$0xff]
    %369 = vmatpush.msra.mxu0 %v368
    %370 = vmatpush.msra.mxu0 %v367
    %371 = vmatpush.msra.mxu0 %v366
    %372 = vmatpush.msra.mxu0 %v365
    %373 = vmatpush.msra.mxu0 %v364
    %374 = vmatpush.msra.mxu0 %v363
    %375 = vmatpush.msra.mxu0 %v362
    %376 = vmatpush.msra.mxu0 %v361
    %377 = vmatpush.msra.mxu0 %v360
    %378 = vmatpush.msra.mxu0 %v359
    %379 = vmatpush.msra.mxu0 %v358
    %380 = vmatpush.msra.mxu0 %v357
    %381 = vmatpush.msra.mxu0 %v356
    %382 = vmatpush.msra.mxu0 %v355
    %383 = vmatpush.msra.mxu0 %v354
    %384 = vmatpush.msra.mxu0 %v353
    %385 = vmatmul.f32.gmra.mxu0 %v348
    %v386 = vpop.f32.mrf.mxu0
    %v387 = vadd.f32 0.0, %v386
    %388 = vmatmul.f32.gmra.mxu0 %v349
    %v389 = vpop.f32.mrf.mxu0
    %v390 = vadd.f32 0.0, %v389
    %391 = vmatmul.f32.gmra.mxu0 %v350
    %v392 = vpop.f32.mrf.mxu0
    %v393 = vadd.f32 0.0, %v392
    %394 = vmatmul.f32.gmra.mxu0 %v351
    %v395 = vpop.f32.mrf.mxu0
    %v396 = vadd.f32 0.0, %v395
    %397 = vdwg.mxu0
    %v398 = vadd.f32 %v337, %v387
    %v399 = vadd.f32 %v340, %v390
    %v400 = vadd.f32 %v343, %v393
    %v401 = vadd.f32 %v346, %v396
    %v402 = vld [vmem:[%s4] sm:$0x1]
    %v404 = vperm.slane %v402, 0
    %v406 = vadd.f32 %v398, %v404
    %v407 = vadd.f32 %v399, %v404
    %v408 = vadd.f32 %v400, %v404
    %v409 = vadd.f32 %v401, %v404
    %v410 = vld [vmem:[#allocation3] sm:$0xff]
    %v411 = vld [vmem:[#allocation3 + $0x8] sm:$0xff]
    %v412 = vld [vmem:[#allocation3 + $0x10] sm:$0xff]
    %v413 = vld [vmem:[#allocation3 + $0x18] sm:$0xff]
    %v414 = vadd.f32 %v410, %v406
    %v415 = vadd.f32 %v411, %v407
    %v416 = vadd.f32 %v412, %v408
    %v417 = vadd.f32 %v413, %v409
    %v418 = vmax.f32 %v414, 0.0
    %v419 = vmax.f32 %v415, 0.0
    %v420 = vmax.f32 %v416, 0.0
    %v421 = vmax.f32 %v417, 0.0
    %422 = vst [vmem:[#allocation9] sm:$0xff] %v418
    %423 = vst [vmem:[#allocation9 + $0x8] sm:$0xff] %v419
    %424 = vst [vmem:[#allocation9 + $0x10] sm:$0xff] %v420
    %425 = vst [vmem:[#allocation9 + $0x18] sm:$0xff] %v421
    // Predicated region
    $region34: #{tpu_custom_call.1} parent=1 // pred_check
      _
    $region35: #{tpu_custom_call.1} parent=1 // pred_check_branch
      %427 = sbr.rel (0) target = $region37
    $region36: #{tpu_custom_call.1} parent=1 // pred_region
      %429 = vsyncadd [#allocation5], 0
      %s430 = sshll.u32 [#allocation9], 4
      %s431 = int_to_ptr.vmem [resolvable:$true] %s430
      %s432 = sshll.u32 %s5, 4
      %s433 = int_to_ptr.hbm [resolvable:$true] %s432
      %438 = dma.vmem_to_hbm [thread:$0]  %s431, 512, %s433, [#allocation5], 128, 128, 8
    $region37: #{tpu_custom_call.1} parent=1 // pred_fallthru
      _
    // Predicated region
    $region38: #{tpu_custom_call.1} parent=1 // pred_check
      _
    $region39: #{tpu_custom_call.1} parent=1 // pred_check_branch
      %440 = sbr.rel (0) target = $region41
    $region40: #{tpu_custom_call.1} parent=1 // pred_region
      %442 = dma.done [#allocation5], 512
    $region41: #{tpu_custom_call.1} parent=1 // pred_fallthru
      _
    %443 = vsyncpa [#allocation4], 1
    %444 = vsyncpa [#allocation7], 1
    %445 = vsyncpa [#allocation5], 1

</llo_original>
